<compile_context>
chip_gen: v7x
topology: tpu7x:2x2x1
jax: 0.10.0
libtpu: 0.0.40
codegen_flags: <defaults>
</compile_context>

<pallas_src>
import functools

import jax
import jax.numpy as jnp
from jax.experimental import pallas as pl
from jax.experimental.pallas import tpu as pltpu


LANE = 128          # TPU lane width: channel padding target
SUBLANE_PACK = 16   # bf16 sublane packing: time-tile / halo granularity


def _round_up(n, m):
    return (n + m - 1) // m * m


# ------------------------------ Pallas kernel ------------------------------ #

def _residual_block_kernel(xa_ref, xh_ref, w_dil_ref, w_res_ref, w_skip_ref,
                           b_res_ref, b_skip_ref, out_ref, skip_ref,
                           *, dilation, first_skip_tile):
    """One (batch, time-tile) step of the WaveNet residual block.

    xa_ref    : (1, tt, CP)    x rows [i*tt, (i+1)*tt)            (bf16)
    xh_ref    : (1, halo, CP)  x rows [(i+1)*tt, (i+1)*tt + halo) (bf16)
    w_dil_ref : (2, CP, CP)    taps [w0; w1] of the dilated conv  (bf16)
    w_res_ref : (CP, CP)       1x1 residual conv weight           (bf16)
    w_skip_ref: (CP, SP)       1x1 skip conv weight               (bf16)
    b_res_ref : (1, CP)  f32,  b_skip_ref : (1, SP) f32
    out_ref   : (1, tt, CP)    residual output rows [i*tt, (i+1)*tt)   (bf16)
    skip_ref  : (1, tt, SP)    skip output rows   [i*tt, (i+1)*tt)     (bf16)
    """
    tt = out_ref.shape[1]

    xa = xa_ref[0]                       # (tt, CP)   bf16
    xh = xh_ref[0]                       # (halo, CP) bf16

    # x1 = x_{t+d}: rows [d, d+tt) of concat(xa, xh).
    x1_f32 = None
    if dilation % SUBLANE_PACK == 0:
        # Sublane-aligned slices: stay in bf16, no f32 materialization.
        parts = ([xa[dilation:, :]] if dilation < tt else []) + [xh[:dilation, :]]
        x1 = parts[0] if len(parts) == 1 else jnp.concatenate(parts, axis=0)
    else:
        # Small (unaligned) dilation: do the sublane-offset slice on an f32
        # copy (safe lowering); the f32 copy is reused for the residual add.
        x1_f32 = jnp.concatenate([xa, xh], axis=0).astype(jnp.float32)[
            dilation:dilation + tt, :]
        x1 = x1_f32.astype(xa.dtype)

    # Dilated causal conv, kernel_size=2: dil[t] = x_t @ w0 + x_{t+d} @ w1.
    dil = jnp.dot(xa, w_dil_ref[0], preferred_element_type=jnp.float32)
    dil = dil + jnp.dot(x1, w_dil_ref[1], preferred_element_type=jnp.float32)

    # Gated activation (f32 on VPU/EUP).
    gated = jnp.tanh(dil) * jax.nn.sigmoid(dil)
    gated_b = gated.astype(jnp.bfloat16)

    # 1x1 residual conv + residual connection (input_cut == x_{t+d}).
    res = jnp.dot(gated_b, w_res_ref[...],
                  preferred_element_type=jnp.float32) + b_res_ref[...]
    resid = x1_f32 if x1_f32 is not None else x1.astype(jnp.float32)
    out_ref[0] = (res + resid).astype(out_ref.dtype)

    # 1x1 skip conv — only for tiles that overlap the skip window.
    def compute_skip():
        sk = jnp.dot(gated_b, w_skip_ref[...],
                     preferred_element_type=jnp.float32) + b_skip_ref[...]
        skip_ref[0] = sk.astype(skip_ref.dtype)

    if first_skip_tile <= 0:
        compute_skip()
    else:
        pl.when(pl.program_id(1) >= first_skip_tile)(compute_skip)


# ------------------------------- wrappers ----------------------------------- #

def residual_block_padded(x_btc, packed, *, dilation, skip_size, t_tile=1024):
    """Core call on lane-padded (B, T, CP) bf16 activations.

    Returns (out_padded (B, n_t*tt, CP) bf16, skip_padded (B, n_t*tt, SP) bf16,
    t_out).  Rows >= t_out in the outputs are padding / garbage.  Keep
    activations in this layout between stacked blocks to avoid per-layer
    transpose/pad HBM passes.
    """
    B, T, cp = x_btc.shape
    sp = packed["w_skip"].shape[1]
    assert packed["w_res"].shape[0] == cp

    t_out = T - dilation
    assert dilation >= 1 and t_out >= 1
    assert skip_size <= t_out, "skip_size must be <= T - dilation"

    # Halo covering the dilated tap; time tiles are multiples of it.
    halo = _round_up(dilation, SUBLANE_PACK)

    # Tile selection: as large as requested, but keep >= ~4 grid steps for
    # small batches (v7x megacore) and >= halo (so one halo block suffices).
    min_steps = max(1, pl.cdiv(4, max(B, 1)))
    tt = min(t_tile, pl.cdiv(t_out, min_steps))
    tt = _round_up(max(tt, halo), halo)
    n_t = pl.cdiv(t_out, tt)

    # Zero-pad time so tile n_t-1 and its halo are in bounds (single pad op).
    t_pad = n_t * tt + halo
    x_pad = jnp.pad(x_btc, ((0, 0), (0, t_pad - T), (0, 0)))

    first_skip_tile = (t_out - skip_size) // tt
    ratio = tt // halo

    kernel = functools.partial(_residual_block_kernel, dilation=dilation,
                               first_skip_tile=first_skip_tile)

    out_p, skip_p = pl.pallas_call(
        kernel,
        grid=(B, n_t),
        in_specs=[
            pl.BlockSpec((1, tt, cp), lambda b, i: (b, i, 0)),               # x tile
            pl.BlockSpec((1, halo, cp), lambda b, i: (b, (i + 1) * ratio, 0)),  # halo
            pl.BlockSpec((2, cp, cp), lambda b, i: (0, 0, 0)),               # dilated W
            pl.BlockSpec((cp, cp), lambda b, i: (0, 0)),                     # W_res
            pl.BlockSpec((cp, sp), lambda b, i: (0, 0)),                     # W_skip
            pl.BlockSpec((1, cp), lambda b, i: (0, 0)),                      # b_res
            pl.BlockSpec((1, sp), lambda b, i: (0, 0)),                      # b_skip
        ],
        out_specs=(
            pl.BlockSpec((1, tt, cp), lambda b, i: (b, i, 0)),
            pl.BlockSpec((1, tt, sp), lambda b, i: (b, i, 0)),
        ),
        out_shape=(
            jax.ShapeDtypeStruct((B, n_t * tt, cp), jnp.bfloat16),
            jax.ShapeDtypeStruct((B, n_t * tt, sp), jnp.bfloat16),
        ),
        compiler_params=pltpu.CompilerParams(
            dimension_semantics=("parallel", "parallel"),
            vmem_limit_bytes=48 * 1024 * 1024),   # safe on v7x's 64 MiB VMEM
    )(x_pad, x_pad, packed["w_dil"], packed["w_res"], packed["w_skip"],
      packed["b_res"], packed["b_skip"])

    return out_p, skip_p, t_out


def residual_block_forward(x_nct, packed, *, dilation, skip_size,
                           c_res, c_skip, t_tile=1024):
    """ResidualBlock.forward(x, skip_size) with PyTorch (N, C, T) layout.

    Returns (output (N, C_res, T - dilation), skip (N, C_skip, skip_size)).
    Layout glue (transpose / channel pad / un-pad) is done once here; stacked
    blocks should chain residual_block_padded directly.
    """
    B, C, T = x_nct.shape
    assert C == c_res
    cp = packed["w_res"].shape[0]

    x_btc = jnp.pad(jnp.transpose(x_nct, (0, 2, 1)).astype(jnp.bfloat16),
                    ((0, 0), (0, 0), (0, cp - C)))

    out_p, skip_p, t_out = residual_block_padded(
        x_btc, packed, dilation=dilation, skip_size=skip_size, t_tile=t_tile)

    out = jnp.transpose(out_p[:, :t_out, :c_res], (0, 2, 1)).astype(jnp.float32)
    skip = jnp.transpose(skip_p[:, t_out - skip_size:t_out, :c_skip],
                         (0, 2, 1)).astype(jnp.float32)
    return out, skip


# -------------------------- parameter construction ------------------------- #

def init_block_params(key, res_channels, skip_channels):
    """PyTorch-shaped ResidualBlock parameters (Conv1d weight layout)."""
    k = jax.random.split(key, 5)
    s = 0.3
    return {
        # DilatedCausalConv1d: Conv1d(C, C, kernel_size=2, bias=False)
        "w_dil": s * jax.random.normal(k[0], (res_channels, res_channels, 2), jnp.float32),
        # conv_res: Conv1d(C, C, 1)
        "w_res": s * jax.random.normal(k[1], (res_channels, res_channels, 1), jnp.float32),
        "b_res": s * jax.random.normal(k[2], (res_channels,), jnp.float32),
        # conv_skip: Conv1d(C, S, 1)
        "w_skip": s * jax.random.normal(k[3], (skip_channels, res_channels, 1), jnp.float32),
        "b_skip": s * jax.random.normal(k[4], (skip_channels,), jnp.float32),
    }


def pack_params(params, res_channels, skip_channels):
    """Pad + transpose PyTorch conv weights into MXU-friendly operands."""
    C, S = res_channels, skip_channels
    cp, sp = _round_up(C, LANE), _round_up(S, LANE)

    def pad2(a, rows, cols):
        return jnp.pad(a, ((0, rows - a.shape[0]), (0, cols - a.shape[1])))

    w0 = pad2(params["w_dil"][:, :, 0].T, cp, cp)      # tap on x_t
    w1 = pad2(params["w_dil"][:, :, 1].T, cp, cp)      # tap on x_{t+d}
    return {
        "w_dil": jnp.stack([w0, w1]).astype(jnp.bfloat16),             # (2,CP,CP)
        "w_res": pad2(params["w_res"][:, :, 0].T, cp, cp).astype(jnp.bfloat16),
        "w_skip": pad2(params["w_skip"][:, :, 0].T, cp, sp).astype(jnp.bfloat16),
        "b_res": jnp.pad(params["b_res"], (0, cp - C))[None, :].astype(jnp.float32),
        "b_skip": jnp.pad(params["b_skip"], (0, sp - S))[None, :].astype(jnp.float32),
    }


# ------------------------------ pure-JAX ref -------------------------------- #

def residual_block_ref(x_nct, params, dilation, skip_size):
    """Pure-JAX f32 reference matching the PyTorch module exactly."""
    t_out = x_nct.shape[2] - dilation
    w0 = params["w_dil"][:, :, 0]
    w1 = params["w_dil"][:, :, 1]
    dil = (jnp.einsum("oi,bit->bot", w0, x_nct[:, :, :t_out])
           + jnp.einsum("oi,bit->bot", w1, x_nct[:, :, dilation:]))
    gated = jnp.tanh(dil) * jax.nn.sigmoid(dil)
    res = (jnp.einsum("oi,bit->bot", params["w_res"][:, :, 0], gated)
           + params["b_res"][None, :, None] + x_nct[:, :, dilation:])
    skip = (jnp.einsum("oi,bit->bot", params["w_skip"][:, :, 0], gated)
            + params["b_skip"][None, :, None])
    return res, skip[:, :, -skip_size:]


# ---------------------------------- main ------------------------------------ #

if __name__ == "__main__":
    B, C_RES, C_SKIP, T = 2, 4, 8, 96
    SKIP_SIZE = 16

    key = jax.random.PRNGKey(0)
    kx, kp = jax.random.split(key)
    x = jax.random.normal(kx, (B, C_RES, T), jnp.float32)   # PyTorch (N, C, T)

    # (dilation, t_tile): exercises the unaligned (f32) halo path, the aligned
    # bf16 halo path (dilation % 16 == 0), multi-tile grids, skip gating, and
    # the large-tile clamp.
    cases = [(1, 16), (2, 16), (16, 32), (1, 4096)]

    for dilation, t_tile in cases:
        params = init_block_params(jax.random.fold_in(kp, dilation), C_RES, C_SKIP)
        packed = pack_params(params, C_RES, C_SKIP)

        fwd = jax.jit(functools.partial(
            residual_block_forward, dilation=dilation, skip_size=SKIP_SIZE,
            c_res=C_RES, c_skip=C_SKIP, t_tile=t_tile))
        out, skip = jax.block_until_ready(fwd(x, packed))

        ref_out, ref_skip = residual_block_ref(x, params, dilation, SKIP_SIZE)
        assert out.shape == (B, C_RES, T - dilation), out.shape
        assert skip.shape == (B, C_SKIP, SKIP_SIZE), skip.shape
        # bf16 matmul operands / bf16 outputs with f32 accumulation.
        assert jnp.allclose(out, ref_out, atol=5e-2, rtol=5e-2), (
            f"residual mismatch at dilation={dilation}, t_tile={t_tile}")
        assert jnp.allclose(skip, ref_skip, atol=5e-2, rtol=5e-2), (
            f"skip mismatch at dilation={dilation}, t_tile={t_tile}")

    print("KERNEL_OK")
</pallas_src>

<mosaic_0001>
module attributes {stable_mosaic.version = 11 : i64} {
  func.func @_residual_block_kernel(%arg0: i32, %arg1: i32, %arg2: memref<1x16x128xbf16, #tpu.memory_space<vmem>>, %arg3: memref<1x16x128xbf16, #tpu.memory_space<vmem>>, %arg4: memref<2x128x128xbf16, #tpu.memory_space<vmem>>, %arg5: memref<128x128xbf16, #tpu.memory_space<vmem>>, %arg6: memref<128x128xbf16, #tpu.memory_space<vmem>>, %arg7: memref<1x128xf32, #tpu.memory_space<vmem>>, %arg8: memref<1x128xf32, #tpu.memory_space<vmem>>, %arg9: memref<1x16x128xbf16, #tpu.memory_space<vmem>>, %arg10: memref<1x16x128xbf16, #tpu.memory_space<vmem>>) attributes {dimension_semantics = [#tpu.dimension_semantics<parallel>, #tpu.dimension_semantics<parallel>], iteration_bounds = array<i64: 2, 6>, scalar_prefetch = 0 : i64, scratch_operands = 0 : i64, tpu.core_type = #tpu.core_type<tc>, window_params = [{transform_indices = @transform_0, window_bounds = array<i64: 1, 16, 128>}, {transform_indices = @transform_1, window_bounds = array<i64: 1, 16, 128>}, {pipeline_mode = #tpu.pipeline_mode<synchronous>, transform_indices = @transform_2, window_bounds = array<i64: 2, 128, 128>}, {pipeline_mode = #tpu.pipeline_mode<synchronous>, transform_indices = @transform_3, window_bounds = array<i64: 128, 128>}, {pipeline_mode = #tpu.pipeline_mode<synchronous>, transform_indices = @transform_4, window_bounds = array<i64: 128, 128>}, {pipeline_mode = #tpu.pipeline_mode<synchronous>, transform_indices = @transform_5, window_bounds = array<i64: 1, 128>}, {pipeline_mode = #tpu.pipeline_mode<synchronous>, transform_indices = @transform_6, window_bounds = array<i64: 1, 128>}, {transform_indices = @transform_7, window_bounds = array<i64: 1, 16, 128>}, {transform_indices = @transform_8, window_bounds = array<i64: 1, 16, 128>}]} {
    %c0 = arith.constant 0 : index
    %c0_0 = arith.constant 0 : index
    %c0_1 = arith.constant 0 : index
    %0 = vector.load %arg2[%c0, %c0_0, %c0_1] : memref<1x16x128xbf16, #tpu.memory_space<vmem>>, vector<1x16x128xbf16>
    %1 = vector.shape_cast %0 : vector<1x16x128xbf16> to vector<16x128xbf16>
    %c0_2 = arith.constant 0 : index
    %c0_3 = arith.constant 0 : index
    %c0_4 = arith.constant 0 : index
    %2 = vector.load %arg3[%c0_2, %c0_3, %c0_4] : memref<1x16x128xbf16, #tpu.memory_space<vmem>>, vector<1x16x128xbf16>
    %3 = vector.shape_cast %2 : vector<1x16x128xbf16> to vector<16x128xbf16>
    %4 = tpu.concatenate %1, %3 in 0 : vector<16x128xbf16>, vector<16x128xbf16> -> vector<32x128xbf16>
    %5 = arith.extf %4 : vector<32x128xbf16> to vector<32x128xf32>
    %6 = vector.extract_strided_slice %5 {offsets = [1, 0], sizes = [16, 128], strides = [1, 1]} : vector<32x128xf32> to vector<16x128xf32>
    %7 = arith.truncf %6 : vector<16x128xf32> to vector<16x128xbf16>
    %c0_5 = arith.constant 0 : index
    %c0_6 = arith.constant 0 : index
    %c0_7 = arith.constant 0 : index
    %8 = vector.load %arg4[%c0_5, %c0_6, %c0_7] : memref<2x128x128xbf16, #tpu.memory_space<vmem>>, vector<1x128x128xbf16>
    %9 = vector.shape_cast %8 : vector<1x128x128xbf16> to vector<128x128xbf16>
    %cst = arith.constant dense<0.000000e+00> : vector<16x128xf32>
    %10 = tpu.matmul %1, %9, %cst {dimension_numbers = #tpu.dot_dimension_numbers<[1], [0], [0], [1], [0, 0, 1, 1], [], []>} : vector<16x128xbf16>, vector<128x128xbf16>, vector<16x128xf32> -> vector<16x128xf32>
    %c1 = arith.constant 1 : index
    %c0_8 = arith.constant 0 : index
    %c0_9 = arith.constant 0 : index
    %11 = vector.load %arg4[%c1, %c0_8, %c0_9] : memref<2x128x128xbf16, #tpu.memory_space<vmem>>, vector<1x128x128xbf16>
    %12 = vector.shape_cast %11 : vector<1x128x128xbf16> to vector<128x128xbf16>
    %cst_10 = arith.constant dense<0.000000e+00> : vector<16x128xf32>
    %13 = tpu.matmul %7, %12, %cst_10 {dimension_numbers = #tpu.dot_dimension_numbers<[1], [0], [0], [1], [0, 0, 1, 1], [], []>} : vector<16x128xbf16>, vector<128x128xbf16>, vector<16x128xf32> -> vector<16x128xf32>
    %14 = arith.addf %10, %13 : vector<16x128xf32>
    %15 = math.tanh %14 : vector<16x128xf32>
    %16 = arith.negf %14 : vector<16x128xf32>
    %17 = math.exp %16 : vector<16x128xf32>
    %cst_11 = arith.constant 1.000000e+00 : f32
    %18 = vector.broadcast %cst_11 : f32 to vector<16x128xf32>
    %19 = arith.addf %18, %17 : vector<16x128xf32>
    %20 = arith.divf %18, %19 : vector<16x128xf32>
    %21 = arith.mulf %15, %20 : vector<16x128xf32>
    %22 = arith.truncf %21 : vector<16x128xf32> to vector<16x128xbf16>
    %c0_12 = arith.constant 0 : index
    %c0_13 = arith.constant 0 : index
    %23 = vector.load %arg5[%c0_12, %c0_13] : memref<128x128xbf16, #tpu.memory_space<vmem>>, vector<128x128xbf16>
    %cst_14 = arith.constant dense<0.000000e+00> : vector<16x128xf32>
    %24 = tpu.matmul %22, %23, %cst_14 {dimension_numbers = #tpu.dot_dimension_numbers<[1], [0], [0], [1], [0, 0, 1, 1], [], []>} : vector<16x128xbf16>, vector<128x128xbf16>, vector<16x128xf32> -> vector<16x128xf32>
    %c0_15 = arith.constant 0 : index
    %c0_16 = arith.constant 0 : index
    %25 = vector.load %arg7[%c0_15, %c0_16] : memref<1x128xf32, #tpu.memory_space<vmem>>, vector<1x128xf32>
    %26 = vector.broadcast %25 : vector<1x128xf32> to vector<16x128xf32>
    %27 = arith.addf %24, %26 : vector<16x128xf32>
    %28 = arith.addf %27, %6 : vector<16x128xf32>
    %29 = arith.truncf %28 : vector<16x128xf32> to vector<16x128xbf16>
    %c0_17 = arith.constant 0 : index
    %c0_18 = arith.constant 0 : index
    %c0_19 = arith.constant 0 : index
    %30 = vector.load %arg9[%c0_17, %c0_18, %c0_19] : memref<1x16x128xbf16, #tpu.memory_space<vmem>>, vector<1x16x128xbf16>
    %31 = vector.shape_cast %30 : vector<1x16x128xbf16> to vector<16x128xbf16>
    %32 = vector.shape_cast %29 : vector<16x128xbf16> to vector<1x16x128xbf16>
    tpu.vector_store %arg9[%c0_17, %c0_18, %c0_19], %32 {strides = array<i32>} : memref<1x16x128xbf16, #tpu.memory_space<vmem>>, vector<1x16x128xbf16>,
    %c4_i32 = arith.constant 4 : i32
    %33 = arith.cmpi sge, %arg1, %c4_i32 : i32
    %34 = arith.extui %33 : i1 to i32
    %c0_i32 = arith.constant 0 : i32
    %35 = arith.cmpi ne, %34, %c0_i32 : i32
    scf.if %35 {
      %c0_20 = arith.constant 0 : index
      %c0_21 = arith.constant 0 : index
      %36 = vector.load %arg6[%c0_20, %c0_21] : memref<128x128xbf16, #tpu.memory_space<vmem>>, vector<128x128xbf16>
      %cst_22 = arith.constant dense<0.000000e+00> : vector<16x128xf32>
      %37 = tpu.matmul %22, %36, %cst_22 {dimension_numbers = #tpu.dot_dimension_numbers<[1], [0], [0], [1], [0, 0, 1, 1], [], []>} : vector<16x128xbf16>, vector<128x128xbf16>, vector<16x128xf32> -> vector<16x128xf32>
      %c0_23 = arith.constant 0 : index
      %c0_24 = arith.constant 0 : index
      %38 = vector.load %arg8[%c0_23, %c0_24] : memref<1x128xf32, #tpu.memory_space<vmem>>, vector<1x128xf32>
      %39 = vector.broadcast %38 : vector<1x128xf32> to vector<16x128xf32>
      %40 = arith.addf %37, %39 : vector<16x128xf32>
      %41 = arith.truncf %40 : vector<16x128xf32> to vector<16x128xbf16>
      %c0_25 = arith.constant 0 : index
      %c0_26 = arith.constant 0 : index
      %c0_27 = arith.constant 0 : index
      %42 = vector.load %arg10[%c0_25, %c0_26, %c0_27] : memref<1x16x128xbf16, #tpu.memory_space<vmem>>, vector<1x16x128xbf16>
      %43 = vector.shape_cast %42 : vector<1x16x128xbf16> to vector<16x128xbf16>
      %44 = vector.shape_cast %41 : vector<16x128xbf16> to vector<1x16x128xbf16>
      tpu.vector_store %arg10[%c0_25, %c0_26, %c0_27], %44 {strides = array<i32>} : memref<1x16x128xbf16, #tpu.memory_space<vmem>>, vector<1x16x128xbf16>,
    } else {
    }
    return
  }
  func.func @transform_0(%arg0: i32, %arg1: i32) -> (i32, i32, i32) {
    %c0_i32 = arith.constant 0 : i32
    %c0_i32_0 = arith.constant 0 : i32
    return %arg0, %arg1, %c0_i32 : i32, i32, i32
  }
  func.func @transform_1(%arg0: i32, %arg1: i32) -> (i32, i32, i32) {
    %c1_i32 = arith.constant 1 : i32
    %0 = arith.addi %arg1, %c1_i32 : i32
    %c1_i32_0 = arith.constant 1 : i32
    %1 = arith.muli %0, %c1_i32_0 : i32
    %c0_i32 = arith.constant 0 : i32
    %c0_i32_1 = arith.constant 0 : i32
    return %arg0, %1, %c0_i32 : i32, i32, i32
  }
  func.func @transform_2(%arg0: i32, %arg1: i32) -> (i32, i32, i32) {
    %c0_i32 = arith.constant 0 : i32
    %c0_i32_0 = arith.constant 0 : i32
    %c0_i32_1 = arith.constant 0 : i32
    %c0_i32_2 = arith.constant 0 : i32
    return %c0_i32, %c0_i32_0, %c0_i32_1 : i32, i32, i32
  }
  func.func @transform_3(%arg0: i32, %arg1: i32) -> (i32, i32) {
    %c0_i32 = arith.constant 0 : i32
    %c0_i32_0 = arith.constant 0 : i32
    %c0_i32_1 = arith.constant 0 : i32
    return %c0_i32, %c0_i32_0 : i32, i32
  }
  func.func @transform_4(%arg0: i32, %arg1: i32) -> (i32, i32) {
    %c0_i32 = arith.constant 0 : i32
    %c0_i32_0 = arith.constant 0 : i32
    %c0_i32_1 = arith.constant 0 : i32
    return %c0_i32, %c0_i32_0 : i32, i32
  }
  func.func @transform_5(%arg0: i32, %arg1: i32) -> (i32, i32) {
    %c0_i32 = arith.constant 0 : i32
    %c0_i32_0 = arith.constant 0 : i32
    %c0_i32_1 = arith.constant 0 : i32
    return %c0_i32, %c0_i32_0 : i32, i32
  }
  func.func @transform_6(%arg0: i32, %arg1: i32) -> (i32, i32) {
    %c0_i32 = arith.constant 0 : i32
    %c0_i32_0 = arith.constant 0 : i32
    %c0_i32_1 = arith.constant 0 : i32
    return %c0_i32, %c0_i32_0 : i32, i32
  }
  func.func @transform_7(%arg0: i32, %arg1: i32) -> (i32, i32, i32) {
    %c0_i32 = arith.constant 0 : i32
    %c0_i32_0 = arith.constant 0 : i32
    return %arg0, %arg1, %c0_i32 : i32, i32, i32
  }
  func.func @transform_8(%arg0: i32, %arg1: i32) -> (i32, i32, i32) {
    %c0_i32 = arith.constant 0 : i32
    %c0_i32_0 = arith.constant 0 : i32
    return %arg0, %arg1, %c0_i32 : i32, i32, i32
  }
}

</mosaic_0001>

<llo_original>
// kernel: residual_block_forward.1
$region0: #{residual_block_forward.1}
  #allocation0 [shape = 'u32[]', space=smem, size = 0x4, offset = 0x4, fixed_abs, tag = 'smem constant byte address 0x4 - core index']
  #allocation1 [shape = 'u32[144,128]{1,0:T(1,128)}', space=vmem, size = 0x12000, scoped, tag = 'internal scratch']
  %s0 = inlined_call_operand.vmem [shape: bf16[2,112,128], index: 0, kind: input, shape index: {}, may-alias: {0,1}]
  %s1 = inlined_call_operand.vmem [shape: bf16[2,112,128], index: 1, kind: input, shape index: {}, may-alias: {0,1}]
  %s2 = inlined_call_operand.vmem [shape: bf16[2,128,128], index: 2, kind: input, shape index: {}]
  %s3 = inlined_call_operand.vmem [shape: bf16[128,128], index: 3, kind: input, shape index: {}]
  %s4 = inlined_call_operand.vmem [shape: bf16[128,128], index: 4, kind: input, shape index: {}]
  %s5 = inlined_call_operand.vmem [shape: f32[1,128], index: 5, kind: input, shape index: {}]
  %s6 = inlined_call_operand.vmem [shape: f32[1,128], index: 6, kind: input, shape index: {}]
  %s7 = inlined_call_operand.vmem [shape: bf16[2,96,128], index: 7, kind: output, shape index: {0}]
  %s8 = inlined_call_operand.vmem [shape: bf16[2,96,128], index: 8, kind: output, shape index: {1}]
  %9 = xla_tuple %s7, %s8
  %s10 = sld [smem:[#allocation0]]
  $region73: #{residual_block_forward.1} parent=0
    _
  %s12 = ssub.s32 1, %s10
  %s13 = scalar_select 0, %s12, %s10
  loop: start=0, step=1, limit=14
  $region2: #{residual_block_forward.1} parent=0 // loop_pre_header
    _
  $region3: #{residual_block_forward.1} parent=0 // loop_header
    %s15 = sphi 0, %s19
    %p16 = scmp.ge.s32.totalorder %s15, 14
    %s22 = sphi 0, %s34
    %s23 = sphi 0, %s30
    %s24 = sphi 0, %s22
    %s25 = sphi 0, %s23
    %s26 = sphi 0, %s24
    %s27 = sphi 0, %s25
    %s39 = sphi 0, %s41
    %s42 = sphi 0, %s39
    %s43 = sphi 0, %s42
    %s59 = sphi 0, %s43
    %s69 = sphi 0, %s71
    %s72 = sphi 0, %s69
    %s73 = sphi 0, %s72
    %s89 = sphi 0, %s73
    %s93 = sphi 0, %s93
    %s95 = sphi 0, %s93
    %s96 = sphi 0, %s95
    %s110 = sphi 0, %s96
    %s114 = sphi 0, %s114
    %s116 = sphi 0, %s114
    %s117 = sphi 0, %s116
    %s131 = sphi 0, %s117
    %s135 = sphi 0, %s135
    %s137 = sphi 0, %s135
    %s138 = sphi 0, %s137
    %s152 = sphi 0, %s138
    %s156 = sphi 0, %s156
    %s158 = sphi 0, %s156
    %s159 = sphi 0, %s158
    %s173 = sphi 0, %s159
    %s177 = sphi 0, %s177
    %s179 = sphi 0, %s177
    %s180 = sphi 0, %s179
    %s194 = sphi 0, %s180
    %s202 = sphi 0, %s204
    %s205 = sphi 0, %s202
    %s206 = sphi 0, %s205
    %s222 = sphi 0, %s206
    %s230 = sphi 0, %s232
    %s233 = sphi 0, %s230
    %s234 = sphi 0, %s233
    %s250 = sphi 0, %s234
  $region4: #{residual_block_forward.1} parent=0 // loop_header_branch
    %18 = sbr.rel (%p16) target = $region8
  $region5: #{residual_block_forward.1} parent=0 // loop_body
    %s20 = ssub.s32 %s15, 1
    %s21 = ssub.s32 %s15, 2
    %s28 = sadd.s32 1, %s23
    %p29 = scmp.ge.s32.totalorder %s28, 6
    %s30 = scalar_select %p29, 0, %s28
    %s31 = sadd.s32 1, %s22
    %s32 = scalar_select %p29, %s31, %s22
    %p33 = scmp.ge.s32.totalorder %s32, 2
    %s34 = scalar_select %p33, 0, %s32
    %s35 = ssub.s32 %s22, %s34
    %s36 = ssub.s32 %s23, %s30
    %s37 = sor.u32 %s35, %s36
    %p38 = scmp.eq.s32.totalorder %s37, 0
    %s40 = sadd.s32 %s39, 1
    %s41 = scalar_select %p38, %s39, %s40
    %p44 = pneg %p38
    %p45 = scmp.eq.s32.totalorder %s15, 11
    %p46 = por %p44, %p45
    %p47 = scmp.ne.s32.totalorder %s39, %s42
    %p48 = scmp.eq.s32.totalorder %s15, 0
    %p49 = por %p47, %p48
    %p50 = scmp.ne.s32.totalorder %s39, %s42
    %p51 = scmp.eq.s32.totalorder %s20, 11
    %p52 = por %p50, %p51
    %p53 = scmp.ne.s32.totalorder %s42, %s43
    %p54 = scmp.eq.s32.totalorder %s20, 0
    %p55 = por %p53, %p54
    %p56 = scmp.ne.s32.totalorder %s42, %s43
    %p57 = scmp.eq.s32.totalorder %s21, 11
    %p58 = por %p56, %p57
    %p60 = scmp.ne.s32.totalorder %s43, %s59
    %p61 = scmp.eq.s32.totalorder %s21, 0
    %p62 = por %p60, %p61
    %s63 = sadd.s32 %s23, 1
    %s64 = sadd.s32 %s30, 1
    %s65 = ssub.s32 %s22, %s34
    %s66 = ssub.s32 %s63, %s64
    %s67 = sor.u32 %s65, %s66
    %p68 = scmp.eq.s32.totalorder %s67, 0
    %s70 = sadd.s32 %s69, 1
    %s71 = scalar_select %p68, %s69, %s70
    %p74 = pneg %p68
    %p75 = scmp.eq.s32.totalorder %s15, 11
    %p76 = por %p74, %p75
    %p77 = scmp.ne.s32.totalorder %s69, %s72
    %p78 = scmp.eq.s32.totalorder %s15, 0
    %p79 = por %p77, %p78
    %p80 = scmp.ne.s32.totalorder %s69, %s72
    %p81 = scmp.eq.s32.totalorder %s20, 11
    %p82 = por %p80, %p81
    %p83 = scmp.ne.s32.totalorder %s72, %s73
    %p84 = scmp.eq.s32.totalorder %s20, 0
    %p85 = por %p83, %p84
    %p86 = scmp.ne.s32.totalorder %s72, %s73
    %p87 = scmp.eq.s32.totalorder %s21, 11
    %p88 = por %p86, %p87
    %p90 = scmp.ne.s32.totalorder %s73, %s89
    %p91 = scmp.eq.s32.totalorder %s21, 0
    %p92 = por %p90, %p91
    %s94 = sadd.s32 %s93, 1
    %p97 = scmp.eq.s32.totalorder %s15, 11
    %p98 = scmp.ne.s32.totalorder %s93, %s95
    %p99 = scmp.eq.s32.totalorder %s15, 0
    %p100 = por %p98, %p99
    %p101 = scmp.ne.s32.totalorder %s93, %s95
    %p102 = scmp.eq.s32.totalorder %s20, 11
    %p103 = por %p101, %p102
    %p104 = scmp.ne.s32.totalorder %s95, %s96
    %p105 = scmp.eq.s32.totalorder %s20, 0
    %p106 = por %p104, %p105
    %p107 = scmp.ne.s32.totalorder %s95, %s96
    %p108 = scmp.eq.s32.totalorder %s21, 11
    %p109 = por %p107, %p108
    %p111 = scmp.ne.s32.totalorder %s96, %s110
    %p112 = scmp.eq.s32.totalorder %s21, 0
    %p113 = por %p111, %p112
    %s115 = sadd.s32 %s114, 1
    %p118 = scmp.eq.s32.totalorder %s15, 11
    %p119 = scmp.ne.s32.totalorder %s114, %s116
    %p120 = scmp.eq.s32.totalorder %s15, 0
    %p121 = por %p119, %p120
    %p122 = scmp.ne.s32.totalorder %s114, %s116
    %p123 = scmp.eq.s32.totalorder %s20, 11
    %p124 = por %p122, %p123
    %p125 = scmp.ne.s32.totalorder %s116, %s117
    %p126 = scmp.eq.s32.totalorder %s20, 0
    %p127 = por %p125, %p126
    %p128 = scmp.ne.s32.totalorder %s116, %s117
    %p129 = scmp.eq.s32.totalorder %s21, 11
    %p130 = por %p128, %p129
    %p132 = scmp.ne.s32.totalorder %s117, %s131
    %p133 = scmp.eq.s32.totalorder %s21, 0
    %p134 = por %p132, %p133
    %s136 = sadd.s32 %s135, 1
    %p139 = scmp.eq.s32.totalorder %s15, 11
    %p140 = scmp.ne.s32.totalorder %s135, %s137
    %p141 = scmp.eq.s32.totalorder %s15, 0
    %p142 = por %p140, %p141
    %p143 = scmp.ne.s32.totalorder %s135, %s137
    %p144 = scmp.eq.s32.totalorder %s20, 11
    %p145 = por %p143, %p144
    %p146 = scmp.ne.s32.totalorder %s137, %s138
    %p147 = scmp.eq.s32.totalorder %s20, 0
    %p148 = por %p146, %p147
    %p149 = scmp.ne.s32.totalorder %s137, %s138
    %p150 = scmp.eq.s32.totalorder %s21, 11
    %p151 = por %p149, %p150
    %p153 = scmp.ne.s32.totalorder %s138, %s152
    %p154 = scmp.eq.s32.totalorder %s21, 0
    %p155 = por %p153, %p154
    %s157 = sadd.s32 %s156, 1
    %p160 = scmp.eq.s32.totalorder %s15, 11
    %p161 = scmp.ne.s32.totalorder %s156, %s158
    %p162 = scmp.eq.s32.totalorder %s15, 0
    %p163 = por %p161, %p162
    %p164 = scmp.ne.s32.totalorder %s156, %s158
    %p165 = scmp.eq.s32.totalorder %s20, 11
    %p166 = por %p164, %p165
    %p167 = scmp.ne.s32.totalorder %s158, %s159
    %p168 = scmp.eq.s32.totalorder %s20, 0
    %p169 = por %p167, %p168
    %p170 = scmp.ne.s32.totalorder %s158, %s159
    %p171 = scmp.eq.s32.totalorder %s21, 11
    %p172 = por %p170, %p171
    %p174 = scmp.ne.s32.totalorder %s159, %s173
    %p175 = scmp.eq.s32.totalorder %s21, 0
    %p176 = por %p174, %p175
    %s178 = sadd.s32 %s177, 1
    %p181 = scmp.eq.s32.totalorder %s15, 11
    %p182 = scmp.ne.s32.totalorder %s177, %s179
    %p183 = scmp.eq.s32.totalorder %s15, 0
    %p184 = por %p182, %p183
    %p185 = scmp.ne.s32.totalorder %s177, %s179
    %p186 = scmp.eq.s32.totalorder %s20, 11
    %p187 = por %p185, %p186
    %p188 = scmp.ne.s32.totalorder %s179, %s180
    %p189 = scmp.eq.s32.totalorder %s20, 0
    %p190 = por %p188, %p189
    %p191 = scmp.ne.s32.totalorder %s179, %s180
    %p192 = scmp.eq.s32.totalorder %s21, 11
    %p193 = por %p191, %p192
    %p195 = scmp.ne.s32.totalorder %s180, %s194
    %p196 = scmp.eq.s32.totalorder %s21, 0
    %p197 = por %p195, %p196
    %s198 = ssub.s32 %s22, %s34
    %s199 = ssub.s32 %s23, %s30
    %s200 = sor.u32 %s198, %s199
    %p201 = scmp.eq.s32.totalorder %s200, 0
    %s203 = sadd.s32 %s202, 1
    %s204 = scalar_select %p201, %s202, %s203
    %p207 = pneg %p201
    %p208 = scmp.eq.s32.totalorder %s15, 11
    %p209 = por %p207, %p208
    %p210 = scmp.ne.s32.totalorder %s202, %s205
    %p211 = scmp.eq.s32.totalorder %s15, 0
    %p212 = por %p210, %p211
    %p213 = scmp.ne.s32.totalorder %s202, %s205
    %p214 = scmp.eq.s32.totalorder %s20, 11
    %p215 = por %p213, %p214
    %p216 = scmp.ne.s32.totalorder %s205, %s206
    %p217 = scmp.eq.s32.totalorder %s20, 0
    %p218 = por %p216, %p217
    %p219 = scmp.ne.s32.totalorder %s205, %s206
    %p220 = scmp.eq.s32.totalorder %s21, 11
    %p221 = por %p219, %p220
    %p223 = scmp.ne.s32.totalorder %s206, %s222
    %p224 = scmp.eq.s32.totalorder %s21, 0
    %p225 = por %p223, %p224
    %s226 = ssub.s32 %s22, %s34
    %s227 = ssub.s32 %s23, %s30
    %s228 = sor.u32 %s226, %s227
    %p229 = scmp.eq.s32.totalorder %s228, 0
    %s231 = sadd.s32 %s230, 1
    %s232 = scalar_select %p229, %s230, %s231
    %p235 = pneg %p229
    %p236 = scmp.eq.s32.totalorder %s15, 11
    %p237 = por %p235, %p236
    %p238 = scmp.ne.s32.totalorder %s230, %s233
    %p239 = scmp.eq.s32.totalorder %s15, 0
    %p240 = por %p238, %p239
    %p241 = scmp.ne.s32.totalorder %s230, %s233
    %p242 = scmp.eq.s32.totalorder %s20, 11
    %p243 = por %p241, %p242
    %p244 = scmp.ne.s32.totalorder %s233, %s234
    %p245 = scmp.eq.s32.totalorder %s20, 0
    %p246 = por %p244, %p245
    %p247 = scmp.ne.s32.totalorder %s233, %s234
    %p248 = scmp.eq.s32.totalorder %s21, 11
    %p249 = por %p247, %p248
    %p251 = scmp.ne.s32.totalorder %s234, %s250
    %p252 = scmp.eq.s32.totalorder %s21, 0
    %p253 = por %p251, %p252
    %p254 = scmp.le.s32.totalorder 1, %s15
    %p255 = scmp.lt.s32.totalorder %s15, 13
    %p256 = pnand %p254, %p255
    %p257 = pneg %p256
    // Predicated region
    $region9: #{residual_block_forward.1} parent=5 // pred_check
      _
    $region10: #{residual_block_forward.1} parent=5 // pred_check_branch
      %259 = sbr.rel (%p256) target = $region12
    $region11: #{residual_block_forward.1} parent=5 // pred_region
      %s260 = ssub.s32 %s15, 1
      // Predicated region
      $region13: #{residual_block_forward.1} parent=11 // pred_check
        %p261 = pneg %p106
      $region14: #{residual_block_forward.1} parent=11 // pred_check_branch
        %263 = sbr.rel (%p261) target = $region16
      $region15: #{residual_block_forward.1} parent=11 // pred_region
        _
      $region16: #{residual_block_forward.1} parent=11 // pred_fallthru
        _
      // Predicated region
      $region17: #{residual_block_forward.1} parent=11 // pred_check
        %p264 = pneg %p127
      $region18: #{residual_block_forward.1} parent=11 // pred_check_branch
        %266 = sbr.rel (%p264) target = $region20
      $region19: #{residual_block_forward.1} parent=11 // pred_region
        _
      $region20: #{residual_block_forward.1} parent=11 // pred_fallthru
        _
      // Predicated region
      $region21: #{residual_block_forward.1} parent=11 // pred_check
        %p267 = pneg %p148
      $region22: #{residual_block_forward.1} parent=11 // pred_check_branch
        %269 = sbr.rel (%p267) target = $region24
      $region23: #{residual_block_forward.1} parent=11 // pred_region
        _
      $region24: #{residual_block_forward.1} parent=11 // pred_fallthru
        _
      // Predicated region
      $region25: #{residual_block_forward.1} parent=11 // pred_check
        %p270 = pneg %p169
      $region26: #{residual_block_forward.1} parent=11 // pred_check_branch
        %272 = sbr.rel (%p270) target = $region28
      $region27: #{residual_block_forward.1} parent=11 // pred_region
        _
      $region28: #{residual_block_forward.1} parent=11 // pred_fallthru
        _
      // Predicated region
      $region29: #{residual_block_forward.1} parent=11 // pred_check
        %p273 = pneg %p190
      $region30: #{residual_block_forward.1} parent=11 // pred_check_branch
        %275 = sbr.rel (%p273) target = $region32
      $region31: #{residual_block_forward.1} parent=11 // pred_region
        _
      $region32: #{residual_block_forward.1} parent=11 // pred_fallthru
        _
    $region12: #{residual_block_forward.1} parent=5 // pred_fallthru
      _
    %p276 = scmp.lt.s32.totalorder %s15, 12
    // Predicated region
    $region33: #{residual_block_forward.1} parent=5 // pred_check
      %p277 = pneg %p276
    $region34: #{residual_block_forward.1} parent=5 // pred_check_branch
      %279 = sbr.rel (%p277) target = $region36
    $region35: #{residual_block_forward.1} parent=5 // pred_region
      // Predicated region
      $region37: #{residual_block_forward.1} parent=35 // pred_check
        %p280 = pneg %p49
      $region38: #{residual_block_forward.1} parent=35 // pred_check_branch
        %282 = sbr.rel (%p280) target = $region40
      $region39: #{residual_block_forward.1} parent=35 // pred_region
        %s283 = smul.u32 2, %s23
        %p284 = scmp.lt.s32.totalorder %s22, 1
        %s285 = scalar_select %p284, %s22, 1
        %p286 = scmp.lt.s32.totalorder %s283, 13
        %s287 = scalar_select %p286, %s283, 13
        %s288 = smul.addr %s285, 14
        %s289 = sadd.s32 %s287, %s288
        %s290 = smul.addr %s289, 4
        %s291 = scalar_lea.vmem %s0, %s290
        %s292 = smul.u32 2, %s23
      $region40: #{residual_block_forward.1} parent=35 // pred_fallthru
        _
      // Predicated region
      $region41: #{residual_block_forward.1} parent=35 // pred_check
        %p293 = pneg %p79
      $region42: #{residual_block_forward.1} parent=35 // pred_check_branch
        %295 = sbr.rel (%p293) target = $region44
      $region43: #{residual_block_forward.1} parent=35 // pred_region
        %s296 = sadd.s32 %s23, 1
        %s297 = smul.u32 2, %s296
        %p298 = scmp.lt.s32.totalorder %s22, 1
        %s299 = scalar_select %p298, %s22, 1
        %p300 = scmp.lt.s32.totalorder %s297, 13
        %s301 = scalar_select %p300, %s297, 13
        %s302 = smul.addr %s299, 14
        %s303 = sadd.s32 %s301, %s302
        %s304 = smul.addr %s303, 4
        %s305 = scalar_lea.vmem %s1, %s304
        %s306 = sadd.s32 %s23, 1
        %s307 = smul.u32 2, %s306
      $region44: #{residual_block_forward.1} parent=35 // pred_fallthru
        _
    $region36: #{residual_block_forward.1} parent=5 // pred_fallthru
      _
    %p308 = scmp.le.s32.totalorder 1, %s15
    %p309 = scmp.lt.s32.totalorder %s15, 13
    %p310 = pnand %p308, %p309
    %p311 = pneg %p310
    // Predicated region
    $region45: #{residual_block_forward.1} parent=5 // pred_check
      _
    $region46: #{residual_block_forward.1} parent=5 // pred_check_branch
      %313 = sbr.rel (%p310) target = $region48
    $region47: #{residual_block_forward.1} parent=5 // pred_region
      %s314 = ssub.s32 %s15, 1
      %s315 = smul.u32 2, %s25
      %p316 = scmp.lt.s32.totalorder %s24, 1
      %s317 = scalar_select %p316, %s24, 1
      %p318 = scmp.lt.s32.totalorder %s315, 13
      %s319 = scalar_select %p318, %s315, 13
      %s320 = smul.addr %s317, 14
      %s321 = sadd.s32 %s319, %s320
      %s322 = smul.addr %s321, 4
      %s323 = scalar_lea.vmem %s0, %s322
      %p324 = pneg %p55
      %p325 = pneg %p52
      %s326 = sadd.s32 %s25, 1
      %s327 = smul.u32 2, %s326
      %p328 = scmp.lt.s32.totalorder %s24, 1
      %s329 = scalar_select %p328, %s24, 1
      %p330 = scmp.lt.s32.totalorder %s327, 13
      %s331 = scalar_select %p330, %s327, 13
      %s332 = smul.addr %s329, 14
      %s333 = sadd.s32 %s331, %s332
      %s334 = smul.addr %s333, 4
      %s335 = scalar_lea.vmem %s1, %s334
      %p336 = pneg %p85
      %p337 = pneg %p82
      %p338 = pneg %p106
      %p339 = pneg %p103
      %p340 = pneg %p127
      %p341 = pneg %p124
      %p342 = pneg %p148
      %p343 = pneg %p145
      %p344 = pneg %p169
      %p345 = pneg %p166
      %p346 = pneg %p190
      %p347 = pneg %p187
      %p348 = pneg %p218
      %p349 = pneg %p215
      %s350 = smul.u32 2, %s25
      %p351 = scmp.lt.s32.totalorder %s24, 1
      %s352 = scalar_select %p351, %s24, 1
      %p353 = scmp.lt.s32.totalorder %s350, 11
      %s354 = scalar_select %p353, %s350, 11
      %s355 = smul.addr %s352, 12
      %s356 = sadd.s32 %s354, %s355
      %s357 = smul.addr %s356, 4
      %s358 = scalar_lea.vmem %s7, %s357
      %p359 = pneg %p246
      %p360 = pneg %p243
      %s361 = smul.u32 2, %s25
      %p362 = scmp.lt.s32.totalorder %s24, 1
      %s363 = scalar_select %p362, %s24, 1
      %p364 = scmp.lt.s32.totalorder %s361, 11
      %s365 = scalar_select %p364, %s361, 11
      %s366 = smul.addr %s363, 12
      %s367 = sadd.s32 %s365, %s366
      %s368 = smul.addr %s367, 4
      %s369 = scalar_lea.vmem %s8, %s368
      %s370 = smul.u32 2, %s25
      %p371 = scmp.lt.s32.totalorder %s24, 1
      %s372 = scalar_select %p371, %s24, 1
      %p373 = scmp.lt.s32.totalorder %s370, 13
      %s374 = scalar_select %p373, %s370, 13
      %s375 = smul.addr %s372, 14
      %s376 = sadd.s32 %s374, %s375
      %s377 = smul.addr %s376, 4
      %s378 = scalar_lea.vmem %s0, %s377
      %s379 = smul.u32 2, %s25
      %s380 = sadd.s32 %s25, 1
      %s381 = smul.u32 2, %s380
      %p382 = scmp.lt.s32.totalorder %s24, 1
      %s383 = scalar_select %p382, %s24, 1
      %p384 = scmp.lt.s32.totalorder %s381, 13
      %s385 = scalar_select %p384, %s381, 13
      %s386 = smul.addr %s383, 14
      %s387 = sadd.s32 %s385, %s386
      %s388 = smul.addr %s387, 4
      %s389 = scalar_lea.vmem %s1, %s388
      %s390 = sadd.s32 %s25, 1
      %s391 = smul.u32 2, %s390
      %s392 = smul.u32 2, %s25
      %p393 = scmp.lt.s32.totalorder %s24, 1
      %s394 = scalar_select %p393, %s24, 1
      %p395 = scmp.lt.s32.totalorder %s392, 11
      %s396 = scalar_select %p395, %s392, 11
      %s397 = smul.addr %s394, 12
      %s398 = sadd.s32 %s396, %s397
      %s399 = smul.addr %s398, 4
      %s400 = scalar_lea.vmem %s7, %s399
      %s401 = smul.u32 2, %s25
      %s402 = smul.u32 2, %s25
      %p403 = scmp.lt.s32.totalorder %s24, 1
      %s404 = scalar_select %p403, %s24, 1
      %p405 = scmp.lt.s32.totalorder %s402, 11
      %s406 = scalar_select %p405, %s402, 11
      %s407 = smul.addr %s404, 12
      %s408 = sadd.s32 %s406, %s407
      %s409 = smul.addr %s408, 4
      %s410 = scalar_lea.vmem %s8, %s409
      %s411 = smul.u32 2, %s25
      %v413 = vld [vmem:[%s378] sm:$0xf]
      %v414 = vld [vmem:[%s378 + $0x4] sm:$0xf]
      %v415 = vld [vmem:[%s389] sm:$0xf]
      %v416 = vld [vmem:[%s389 + $0x4] sm:$0xf]
      %v419 = vunpack.c.l.b16 %v413
      %v420 = vunpack.c.l.b16 %v414
      %v421 = vpack.c.b16 %v420, %v419
      %v425 = vunpack.c.l.b16 %v415
      %v426 = vunpack.c.l.b16 %v416
      %v427 = vpack.c.b16 %v426, %v425
      %v429 = vunpack.c.l.bf16 %v421
      %v430 = vunpack.c.h.bf16 %v421
      %v431 = vunpack.c.l.bf16 %v427
      %v432 = vpack.c.bf16 %v430, %v429
      %v433 = vpack.c.bf16 %v431, %v431
      %v434 = vld [vmem:[%s2] sm:$0xf]
      %v435 = vld [vmem:[%s2 + $0x4] sm:$0xf]
      %v436 = vld [vmem:[%s2 + $0x8] sm:$0xf]
      %v437 = vld [vmem:[%s2 + $0xc] sm:$0xf]
      %v438 = vld [vmem:[%s2 + $0x10] sm:$0xf]
      %v439 = vld [vmem:[%s2 + $0x14] sm:$0xf]
      %v440 = vld [vmem:[%s2 + $0x18] sm:$0xf]
      %v441 = vld [vmem:[%s2 + $0x1c] sm:$0xf]
      %v442 = vld [vmem:[%s2 + $0x20] sm:$0xf]
      %v443 = vld [vmem:[%s2 + $0x24] sm:$0xf]
      %v444 = vld [vmem:[%s2 + $0x28] sm:$0xf]
      %v445 = vld [vmem:[%s2 + $0x2c] sm:$0xf]
      %v446 = vld [vmem:[%s2 + $0x30] sm:$0xf]
      %v447 = vld [vmem:[%s2 + $0x34] sm:$0xf]
      %v448 = vld [vmem:[%s2 + $0x38] sm:$0xf]
      %v449 = vld [vmem:[%s2 + $0x3c] sm:$0xf]
      %s450 = scalar_lea.vmem %s2, 64
      %v451 = vld [vmem:[%s450] sm:$0xf]
      %v452 = vld [vmem:[%s450 + $0x4] sm:$0xf]
      %v453 = vld [vmem:[%s450 + $0x8] sm:$0xf]
      %v454 = vld [vmem:[%s450 + $0xc] sm:$0xf]
      %v455 = vld [vmem:[%s450 + $0x10] sm:$0xf]
      %v456 = vld [vmem:[%s450 + $0x14] sm:$0xf]
      %v457 = vld [vmem:[%s450 + $0x18] sm:$0xf]
      %v458 = vld [vmem:[%s450 + $0x1c] sm:$0xf]
      %v459 = vld [vmem:[%s450 + $0x20] sm:$0xf]
      %v460 = vld [vmem:[%s450 + $0x24] sm:$0xf]
      %v461 = vld [vmem:[%s450 + $0x28] sm:$0xf]
      %v462 = vld [vmem:[%s450 + $0x2c] sm:$0xf]
      %v463 = vld [vmem:[%s450 + $0x30] sm:$0xf]
      %v464 = vld [vmem:[%s450 + $0x34] sm:$0xf]
      %v465 = vld [vmem:[%s450 + $0x38] sm:$0xf]
      %v466 = vld [vmem:[%s450 + $0x3c] sm:$0xf]
      %vm467 = vsmask.f32 7424
      %v469 = vshrl.u32 %v432, 16
      %v471 = vshll.u32 %v432, 16
      %v473 = vrot.slane %v471, 1
      %v474 = vor.u32 %v469, %v473
      %v476 = vshll.u32 %v433, 16
      %v478 = vrot.slane %v476, 1
      %v479 = vsel %vm467, %v474, %v478
      %v497 = vunpack.c.l.b16 %v451
      %v498 = vunpack.c.l.b16 %v452
      %v499 = vunpack.c.l.b16 %v453
      %v500 = vunpack.c.l.b16 %v454
      %v501 = vunpack.c.l.b16 %v455
      %v502 = vunpack.c.l.b16 %v456
      %v503 = vunpack.c.l.b16 %v457
      %v504 = vunpack.c.l.b16 %v458
      %v505 = vunpack.c.l.b16 %v459
      %v506 = vunpack.c.l.b16 %v460
      %v507 = vunpack.c.l.b16 %v461
      %v508 = vunpack.c.l.b16 %v462
      %v509 = vunpack.c.l.b16 %v463
      %v510 = vunpack.c.l.b16 %v464
      %v511 = vunpack.c.l.b16 %v465
      %v512 = vunpack.c.l.b16 %v466
      %v513 = vpack.c.b16 %v498, %v497
      %v514 = vpack.c.b16 %v500, %v499
      %v515 = vpack.c.b16 %v502, %v501
      %v516 = vpack.c.b16 %v504, %v503
      %v517 = vpack.c.b16 %v506, %v505
      %v518 = vpack.c.b16 %v508, %v507
      %v519 = vpack.c.b16 %v510, %v509
      %v520 = vpack.c.b16 %v512, %v511
      %529 = vmatprep.subr.bf16.mxu0 0
      %530 = vmatpush1.bf16.msra.mxu0 %v513
      %531 = vmatprep.subr.bf16.mxu0 0
      %532 = vmatpush1.bf16.msra.mxu0 %v514
      %533 = vmatprep.subr.bf16.mxu0 0
      %534 = vmatpush1.bf16.msra.mxu0 %v515
      %535 = vmatprep.subr.bf16.mxu0 0
      %536 = vmatpush1.bf16.msra.mxu0 %v516
      %537 = vmatprep.subr.bf16.mxu0 0
      %538 = vmatpush1.bf16.msra.mxu0 %v517
      %539 = vmatprep.subr.bf16.mxu0 0
      %540 = vmatpush1.bf16.msra.mxu0 %v518
      %541 = vmatprep.subr.bf16.mxu0 0
      %542 = vmatpush1.bf16.msra.mxu0 %v519
      %543 = vmatprep.subr.bf16.mxu0 0
      %544 = vmatpush1.bf16.msra.mxu0 %v520
      %545 = vmatprep.subr.bf16.mxu0 0
      %546 = vmatpush1.bf16.msra.mxu0 0
      %547 = vmatprep.subr.bf16.mxu0 0
      %548 = vmatpush1.bf16.msra.mxu0 0
      %549 = vmatprep.subr.bf16.mxu0 0
      %550 = vmatpush1.bf16.msra.mxu0 0
      %551 = vmatprep.subr.bf16.mxu0 0
      %552 = vmatpush1.bf16.msra.mxu0 0
      %553 = vmatprep.subr.bf16.mxu0 0
      %554 = vmatpush1.bf16.msra.mxu0 0
      %555 = vmatprep.subr.bf16.mxu0 0
      %556 = vmatpush1.bf16.msra.mxu0 0
      %557 = vmatprep.subr.bf16.mxu0 0
      %558 = vmatpush1.bf16.msra.mxu0 0
      %559 = vmatprep.subr.bf16.mxu0 0
      %560 = vmatpush1.bf16.msra.mxu0 0
      %561 = vmatprep.mubr.bf16.mxu0 0
      %562 = vmatmul.mubr.bf16.gmra.mrb[0].mxu0 %v479
      %v563 = vpop.f32.mrb[0].mxu0
      %v564 = vadd.f32 0.0, %v563
      %v565 = vpop.f32.mrb[0].mxu0
      %v566 = vpop.f32.mrb[0].mxu0
      %v567 = vadd.f32 0.0, %v566
      %v568 = vpop.f32.mrb[0].mxu0
      %569 = vdwg.mxu0
      %v586 = vunpack.c.l.b16 %v434
      %v587 = vunpack.c.l.b16 %v435
      %v588 = vunpack.c.l.b16 %v436
      %v589 = vunpack.c.l.b16 %v437
      %v590 = vunpack.c.l.b16 %v438
      %v591 = vunpack.c.l.b16 %v439
      %v592 = vunpack.c.l.b16 %v440
      %v593 = vunpack.c.l.b16 %v441
      %v594 = vunpack.c.l.b16 %v442
      %v595 = vunpack.c.l.b16 %v443
      %v596 = vunpack.c.l.b16 %v444
      %v597 = vunpack.c.l.b16 %v445
      %v598 = vunpack.c.l.b16 %v446
      %v599 = vunpack.c.l.b16 %v447
      %v600 = vunpack.c.l.b16 %v448
      %v601 = vunpack.c.l.b16 %v449
      %v602 = vpack.c.b16 %v587, %v586
      %v603 = vpack.c.b16 %v589, %v588
      %v604 = vpack.c.b16 %v591, %v590
      %v605 = vpack.c.b16 %v593, %v592
      %v606 = vpack.c.b16 %v595, %v594
      %v607 = vpack.c.b16 %v597, %v596
      %v608 = vpack.c.b16 %v599, %v598
      %v609 = vpack.c.b16 %v601, %v600
      %618 = vmatprep.subr.bf16.mxu0 0
      %619 = vmatpush1.bf16.msra.mxu0 %v602
      %620 = vmatprep.subr.bf16.mxu0 0
      %621 = vmatpush1.bf16.msra.mxu0 %v603
      %622 = vmatprep.subr.bf16.mxu0 0
      %623 = vmatpush1.bf16.msra.mxu0 %v604
      %624 = vmatprep.subr.bf16.mxu0 0
      %625 = vmatpush1.bf16.msra.mxu0 %v605
      %626 = vmatprep.subr.bf16.mxu0 0
      %627 = vmatpush1.bf16.msra.mxu0 %v606
      %628 = vmatprep.subr.bf16.mxu0 0
      %629 = vmatpush1.bf16.msra.mxu0 %v607
      %630 = vmatprep.subr.bf16.mxu0 0
      %631 = vmatpush1.bf16.msra.mxu0 %v608
      %632 = vmatprep.subr.bf16.mxu0 0
      %633 = vmatpush1.bf16.msra.mxu0 %v609
      %634 = vmatprep.subr.bf16.mxu0 0
      %635 = vmatpush1.bf16.msra.mxu0 0
      %636 = vmatprep.subr.bf16.mxu0 0
      %637 = vmatpush1.bf16.msra.mxu0 0
      %638 = vmatprep.subr.bf16.mxu0 0
      %639 = vmatpush1.bf16.msra.mxu0 0
      %640 = vmatprep.subr.bf16.mxu0 0
      %641 = vmatpush1.bf16.msra.mxu0 0
      %642 = vmatprep.subr.bf16.mxu0 0
      %643 = vmatpush1.bf16.msra.mxu0 0
      %644 = vmatprep.subr.bf16.mxu0 0
      %645 = vmatpush1.bf16.msra.mxu0 0
      %646 = vmatprep.subr.bf16.mxu0 0
      %647 = vmatpush1.bf16.msra.mxu0 0
      %648 = vmatprep.subr.bf16.mxu0 0
      %649 = vmatpush1.bf16.msra.mxu0 0
      %650 = vmatprep.mubr.bf16.mxu0 0
      %651 = vmatmul.mubr.bf16.gmra.mrb[0].mxu0 %v421
      %v652 = vpop.f32.mrb[0].mxu0
      %v653 = vadd.f32 %v564, %v652
      %v654 = vpop.f32.mrb[0].mxu0
      %v655 = vpop.f32.mrb[0].mxu0
      %v656 = vadd.f32 %v567, %v655
      %v657 = vpop.f32.mrb[0].mxu0
      %658 = vdwg.mxu0
      %v659 = vtanh.pop %v653
      %v660 = vtanh.pop %v656
      %v661 = vxor.u32 %v653, 2147483648
      %v662 = vxor.u32 %v656, 2147483648
      %v663 = vmul.f32 %v661, 1.442695
      %v664 = vpow.pop %v663
      %v665 = vmul.f32 %v662, 1.442695
      %v666 = vpow.pop %v665
      %v667 = vadd.f32 %v664, 1.0
      %v668 = vadd.f32 %v666, 1.0
      %v669 = vrcp.pop %v667
      %v670 = vmul.f32 1.0, %v669
      %v671 = vrcp.pop %v668
      %v672 = vmul.f32 1.0, %v671
      %v673 = vmul.f32 %v659, %v670
      %v674 = vmul.f32 %v660, %v672
      %v675 = vpack.c.bf16 %v674, %v673
      %v676 = vld [vmem:[%s3] sm:$0xf]
      %v677 = vld [vmem:[%s3 + $0x4] sm:$0xf]
      %v678 = vld [vmem:[%s3 + $0x8] sm:$0xf]
      %v679 = vld [vmem:[%s3 + $0xc] sm:$0xf]
      %v680 = vld [vmem:[%s3 + $0x10] sm:$0xf]
      %v681 = vld [vmem:[%s3 + $0x14] sm:$0xf]
      %v682 = vld [vmem:[%s3 + $0x18] sm:$0xf]
      %v683 = vld [vmem:[%s3 + $0x1c] sm:$0xf]
      %v684 = vld [vmem:[%s3 + $0x20] sm:$0xf]
      %v685 = vld [vmem:[%s3 + $0x24] sm:$0xf]
      %v686 = vld [vmem:[%s3 + $0x28] sm:$0xf]
      %v687 = vld [vmem:[%s3 + $0x2c] sm:$0xf]
      %v688 = vld [vmem:[%s3 + $0x30] sm:$0xf]
      %v689 = vld [vmem:[%s3 + $0x34] sm:$0xf]
      %v690 = vld [vmem:[%s3 + $0x38] sm:$0xf]
      %v691 = vld [vmem:[%s3 + $0x3c] sm:$0xf]
      %v692 = vld [vmem:[%s5] sm:$0x1]
      %v694 = vlaneseq
      %v695 = vshrl.u32 %v694, 7
      %v696 = vsub.s32 0, %v695
      %v697 = vrot.slane %v692, %v696
      %v715 = vunpack.c.l.b16 %v676
      %v716 = vunpack.c.l.b16 %v677
      %v717 = vunpack.c.l.b16 %v678
      %v718 = vunpack.c.l.b16 %v679
      %v719 = vunpack.c.l.b16 %v680
      %v720 = vunpack.c.l.b16 %v681
      %v721 = vunpack.c.l.b16 %v682
      %v722 = vunpack.c.l.b16 %v683
      %v723 = vunpack.c.l.b16 %v684
      %v724 = vunpack.c.l.b16 %v685
      %v725 = vunpack.c.l.b16 %v686
      %v726 = vunpack.c.l.b16 %v687
      %v727 = vunpack.c.l.b16 %v688
      %v728 = vunpack.c.l.b16 %v689
      %v729 = vunpack.c.l.b16 %v690
      %v730 = vunpack.c.l.b16 %v691
      %v731 = vpack.c.b16 %v716, %v715
      %v732 = vpack.c.b16 %v718, %v717
      %v733 = vpack.c.b16 %v720, %v719
      %v734 = vpack.c.b16 %v722, %v721
      %v735 = vpack.c.b16 %v724, %v723
      %v736 = vpack.c.b16 %v726, %v725
      %v737 = vpack.c.b16 %v728, %v727
      %v738 = vpack.c.b16 %v730, %v729
      %747 = vmatprep.subr.bf16.mxu0 0
      %748 = vmatpush1.bf16.msra.mxu0 %v731
      %749 = vmatprep.subr.bf16.mxu0 0
      %750 = vmatpush1.bf16.msra.mxu0 %v732
      %751 = vmatprep.subr.bf16.mxu0 0
      %752 = vmatpush1.bf16.msra.mxu0 %v733
      %753 = vmatprep.subr.bf16.mxu0 0
      %754 = vmatpush1.bf16.msra.mxu0 %v734
      %755 = vmatprep.subr.bf16.mxu0 0
      %756 = vmatpush1.bf16.msra.mxu0 %v735
      %757 = vmatprep.subr.bf16.mxu0 0
      %758 = vmatpush1.bf16.msra.mxu0 %v736
      %759 = vmatprep.subr.bf16.mxu0 0
      %760 = vmatpush1.bf16.msra.mxu0 %v737
      %761 = vmatprep.subr.bf16.mxu0 0
      %762 = vmatpush1.bf16.msra.mxu0 %v738
      %763 = vmatprep.subr.bf16.mxu0 0
      %764 = vmatpush1.bf16.msra.mxu0 0
      %765 = vmatprep.subr.bf16.mxu0 0
      %766 = vmatpush1.bf16.msra.mxu0 0
      %767 = vmatprep.subr.bf16.mxu0 0
      %768 = vmatpush1.bf16.msra.mxu0 0
      %769 = vmatprep.subr.bf16.mxu0 0
      %770 = vmatpush1.bf16.msra.mxu0 0
      %771 = vmatprep.subr.bf16.mxu0 0
      %772 = vmatpush1.bf16.msra.mxu0 0
      %773 = vmatprep.subr.bf16.mxu0 0
      %774 = vmatpush1.bf16.msra.mxu0 0
      %775 = vmatprep.subr.bf16.mxu0 0
      %776 = vmatpush1.bf16.msra.mxu0 0
      %777 = vmatprep.subr.bf16.mxu0 0
      %778 = vmatpush1.bf16.msra.mxu0 0
      %779 = vmatprep.mubr.bf16.mxu0 0
      %780 = vmatmul.mubr.bf16.gmra.mrb[0].mxu0 %v675
      %v781 = vpop.f32.mrb[0].mxu0
      %v782 = vadd.f32 %v697, %v781
      %v783 = vpop.f32.mrb[0].mxu0
      %v784 = vpop.f32.mrb[0].mxu0
      %v785 = vadd.f32 %v697, %v784
      %v786 = vpop.f32.mrb[0].mxu0
      %787 = vdwg.mxu0
      %vm791 = vcmask 1046528
      %v792 = vrot.slane %v429, 1
      %v793 = vrot.slane %v430, 1
      %v794 = vsel %vm791, %v792, %v793
      %v795 = vrot.slane %v431, 1
      %v796 = vsel %vm791, %v793, %v795
      %v799 = vadd.f32 %v782, %v794
      %v800 = vadd.f32 %v785, %v796
      %v801 = vpack.c.bf16 %v800, %v799
      %v803 = vunpack.c.l.b16 %v801
      %v804 = vunpack.c.h.b16 %v801
      %v805 = vpack.c.b16 %v803, %v803
      %v806 = vpack.c.b16 %v804, %v804
      %809 = vst [vmem:[%s400] sm:$0xf] %v805
      %810 = vst [vmem:[%s400 + $0x4] sm:$0xf] %v806
      %p811 = scmp.ge.s32.totalorder %s25, 4
      // Predicated region
      $region49: #{residual_block_forward.1} parent=47 // pred_check
        %p812 = pneg %p811
      $region50: #{residual_block_forward.1} parent=47 // pred_check_branch
        %814 = sbr.rel (%p812) target = $region52
      $region51: #{residual_block_forward.1} parent=47 // pred_region
        %v815 = vld [vmem:[%s4] sm:$0xf]
        %v816 = vld [vmem:[%s4 + $0x4] sm:$0xf]
        %v817 = vld [vmem:[%s4 + $0x8] sm:$0xf]
        %v818 = vld [vmem:[%s4 + $0xc] sm:$0xf]
        %v819 = vld [vmem:[%s4 + $0x10] sm:$0xf]
        %v820 = vld [vmem:[%s4 + $0x14] sm:$0xf]
        %v821 = vld [vmem:[%s4 + $0x18] sm:$0xf]
        %v822 = vld [vmem:[%s4 + $0x1c] sm:$0xf]
        %v823 = vld [vmem:[%s4 + $0x20] sm:$0xf]
        %v824 = vld [vmem:[%s4 + $0x24] sm:$0xf]
        %v825 = vld [vmem:[%s4 + $0x28] sm:$0xf]
        %v826 = vld [vmem:[%s4 + $0x2c] sm:$0xf]
        %v827 = vld [vmem:[%s4 + $0x30] sm:$0xf]
        %v828 = vld [vmem:[%s4 + $0x34] sm:$0xf]
        %v829 = vld [vmem:[%s4 + $0x38] sm:$0xf]
        %v830 = vld [vmem:[%s4 + $0x3c] sm:$0xf]
        %v831 = vld [vmem:[%s6] sm:$0x1]
        %v833 = vlaneseq
        %v834 = vshrl.u32 %v833, 7
        %v835 = vsub.s32 0, %v834
        %v836 = vrot.slane %v831, %v835
        %v854 = vunpack.c.l.b16 %v815
        %v855 = vunpack.c.l.b16 %v816
        %v856 = vunpack.c.l.b16 %v817
        %v857 = vunpack.c.l.b16 %v818
        %v858 = vunpack.c.l.b16 %v819
        %v859 = vunpack.c.l.b16 %v820
        %v860 = vunpack.c.l.b16 %v821
        %v861 = vunpack.c.l.b16 %v822
        %v862 = vunpack.c.l.b16 %v823
        %v863 = vunpack.c.l.b16 %v824
        %v864 = vunpack.c.l.b16 %v825
        %v865 = vunpack.c.l.b16 %v826
        %v866 = vunpack.c.l.b16 %v827
        %v867 = vunpack.c.l.b16 %v828
        %v868 = vunpack.c.l.b16 %v829
        %v869 = vunpack.c.l.b16 %v830
        %v870 = vpack.c.b16 %v855, %v854
        %v871 = vpack.c.b16 %v857, %v856
        %v872 = vpack.c.b16 %v859, %v858
        %v873 = vpack.c.b16 %v861, %v860
        %v874 = vpack.c.b16 %v863, %v862
        %v875 = vpack.c.b16 %v865, %v864
        %v876 = vpack.c.b16 %v867, %v866
        %v877 = vpack.c.b16 %v869, %v868
        %886 = vmatprep.subr.bf16.mxu0 0
        %887 = vmatpush1.bf16.msra.mxu0 %v870
        %888 = vmatprep.subr.bf16.mxu0 0
        %889 = vmatpush1.bf16.msra.mxu0 %v871
        %890 = vmatprep.subr.bf16.mxu0 0
        %891 = vmatpush1.bf16.msra.mxu0 %v872
        %892 = vmatprep.subr.bf16.mxu0 0
        %893 = vmatpush1.bf16.msra.mxu0 %v873
        %894 = vmatprep.subr.bf16.mxu0 0
        %895 = vmatpush1.bf16.msra.mxu0 %v874
        %896 = vmatprep.subr.bf16.mxu0 0
        %897 = vmatpush1.bf16.msra.mxu0 %v875
        %898 = vmatprep.subr.bf16.mxu0 0
        %899 = vmatpush1.bf16.msra.mxu0 %v876
        %900 = vmatprep.subr.bf16.mxu0 0
        %901 = vmatpush1.bf16.msra.mxu0 %v877
        %902 = vmatprep.subr.bf16.mxu0 0
        %903 = vmatpush1.bf16.msra.mxu0 0
        %904 = vmatprep.subr.bf16.mxu0 0
        %905 = vmatpush1.bf16.msra.mxu0 0
        %906 = vmatprep.subr.bf16.mxu0 0
        %907 = vmatpush1.bf16.msra.mxu0 0
        %908 = vmatprep.subr.bf16.mxu0 0
        %909 = vmatpush1.bf16.msra.mxu0 0
        %910 = vmatprep.subr.bf16.mxu0 0
        %911 = vmatpush1.bf16.msra.mxu0 0
        %912 = vmatprep.subr.bf16.mxu0 0
        %913 = vmatpush1.bf16.msra.mxu0 0
        %914 = vmatprep.subr.bf16.mxu0 0
        %915 = vmatpush1.bf16.msra.mxu0 0
        %916 = vmatprep.subr.bf16.mxu0 0
        %917 = vmatpush1.bf16.msra.mxu0 0
        %918 = vmatprep.mubr.bf16.mxu0 0
        %919 = vmatmul.mubr.bf16.gmra.mrb[0].mxu0 %v675
        %v920 = vpop.f32.mrb[0].mxu0
        %v921 = vadd.f32 %v836, %v920
        %v922 = vpop.f32.mrb[0].mxu0
        %v923 = vpop.f32.mrb[0].mxu0
        %v924 = vadd.f32 %v836, %v923
        %v925 = vpop.f32.mrb[0].mxu0
        %926 = vdwg.mxu0
        %v927 = vpack.c.bf16 %v924, %v921
        %v929 = vunpack.c.l.b16 %v927
        %v930 = vunpack.c.h.b16 %v927
        %v931 = vpack.c.b16 %v929, %v929
        %v932 = vpack.c.b16 %v930, %v930
        %935 = vst [vmem:[%s410] sm:$0xf] %v931
        %936 = vst [vmem:[%s410 + $0x4] sm:$0xf] %v932
      $region52: #{residual_block_forward.1} parent=47 // pred_fallthru
        _
      %s937 = smul.u32 2, %s25
      %p938 = scmp.lt.s32.totalorder %s24, 1
      %s939 = scalar_select %p938, %s24, 1
      %p940 = scmp.lt.s32.totalorder %s937, 11
      %s941 = scalar_select %p940, %s937, 11
      %s942 = smul.addr %s939, 12
      %s943 = sadd.s32 %s941, %s942
      %s944 = smul.addr %s943, 4
      %s945 = scalar_lea.vmem %s7, %s944
      %s946 = smul.u32 2, %s25
      %p947 = scmp.lt.s32.totalorder %s24, 1
      %s948 = scalar_select %p947, %s24, 1
      %p949 = scmp.lt.s32.totalorder %s946, 11
      %s950 = scalar_select %p949, %s946, 11
      %s951 = smul.addr %s948, 12
      %s952 = sadd.s32 %s950, %s951
      %s953 = smul.addr %s952, 4
      %s954 = scalar_lea.vmem %s8, %s953
      // Predicated region
      $region53: #{residual_block_forward.1} parent=47 // pred_check
        %p955 = pneg %p215
      $region54: #{residual_block_forward.1} parent=47 // pred_check_branch
        %957 = sbr.rel (%p955) target = $region56
      $region55: #{residual_block_forward.1} parent=47 // pred_region
        %s958 = smul.u32 2, %s25
      $region56: #{residual_block_forward.1} parent=47 // pred_fallthru
        _
      // Predicated region
      $region57: #{residual_block_forward.1} parent=47 // pred_check
        %p959 = pneg %p243
      $region58: #{residual_block_forward.1} parent=47 // pred_check_branch
        %961 = sbr.rel (%p959) target = $region60
      $region59: #{residual_block_forward.1} parent=47 // pred_region
        %s962 = smul.u32 2, %s25
      $region60: #{residual_block_forward.1} parent=47 // pred_fallthru
        _
    $region48: #{residual_block_forward.1} parent=5 // pred_fallthru
      _
    %p963 = scmp.le.s32.totalorder 2, %s15
    // Predicated region
    $region61: #{residual_block_forward.1} parent=5 // pred_check
      %p964 = pneg %p963
    $region62: #{residual_block_forward.1} parent=5 // pred_check_branch
      %966 = sbr.rel (%p964) target = $region64
    $region63: #{residual_block_forward.1} parent=5 // pred_region
      %s967 = ssub.s32 %s15, 2
      // Predicated region
      $region65: #{residual_block_forward.1} parent=63 // pred_check
        %p968 = pneg %p221
      $region66: #{residual_block_forward.1} parent=63 // pred_check_branch
        %970 = sbr.rel (%p968) target = $region68
      $region67: #{residual_block_forward.1} parent=63 // pred_region
        %s971 = smul.u32 2, %s27
        %p972 = scmp.lt.s32.totalorder %s26, 1
        %s973 = scalar_select %p972, %s26, 1
        %p974 = scmp.lt.s32.totalorder %s971, 11
        %s975 = scalar_select %p974, %s971, 11
        %s976 = smul.addr %s973, 12
        %s977 = sadd.s32 %s975, %s976
        %s978 = smul.addr %s977, 4
        %s979 = scalar_lea.vmem %s7, %s978
      $region68: #{residual_block_forward.1} parent=63 // pred_fallthru
        _
      // Predicated region
      $region69: #{residual_block_forward.1} parent=63 // pred_check
        %p980 = pneg %p249
      $region70: #{residual_block_forward.1} parent=63 // pred_check_branch
        %982 = sbr.rel (%p980) target = $region72
      $region71: #{residual_block_forward.1} parent=63 // pred_region
        %s983 = smul.u32 2, %s27
        %p984 = scmp.lt.s32.totalorder %s26, 1
        %s985 = scalar_select %p984, %s26, 1
        %p986 = scmp.lt.s32.totalorder %s983, 11
        %s987 = scalar_select %p986, %s983, 11
        %s988 = smul.addr %s985, 12
        %s989 = sadd.s32 %s987, %s988
        %s990 = smul.addr %s989, 4
        %s991 = scalar_lea.vmem %s8, %s990
      $region72: #{residual_block_forward.1} parent=63 // pred_fallthru
        _
    $region64: #{residual_block_forward.1} parent=5 // pred_fallthru
      _
  $region6: #{residual_block_forward.1} parent=0 // loop_footer
    %s19 = sadd.s32 1, %s15
  $region7: #{residual_block_forward.1} parent=0 // loop_footer_branch
    %14 = sbr.rel target = $region3
  $region8: #{residual_block_forward.1} parent=0 // loop_exit
    _

</llo_original>
